<compile_context>
chip_gen: v6e
topology: v6e:2x2x1
jax: 0.10.0
libtpu: 0.0.40
codegen_flags: <defaults>
</compile_context>

<pallas_src>
import math

import jax
import jax.numpy as jnp
from jax.experimental import pallas as pl
from jax.experimental.pallas import tpu as pltpu


_VMEM_LIMIT = 48 * 1024 * 1024          # safe on v7x (64 MiB) and v5e/v6e (128 MiB)
_PIPELINE_BUDGET = 40 * 1024 * 1024     # target for double-buffered working set
_HN_RESIDENT_BYTES = 8 * 1024 * 1024    # keep hn fully VMEM-resident below this


def _round_up(x, m):
    return ((x + m - 1) // m) * m


def _pick_tile(n_pad, max_tile, min_blocks=1):
    """Largest multiple of 128 <= max_tile dividing n_pad with >= min_blocks blocks."""
    best = 128
    for t in range(128, min(max_tile, n_pad) + 1, 128):
        if n_pad % t == 0 and n_pad // t >= min_blocks:
            best = t
    return best


def _stage2_tiles(n_pad, out_pad, hn_resident):
    # >= 2 row blocks when possible so the "parallel" axis uses both v7x cores.
    tm = _pick_tile(n_pad, 512, min_blocks=2)
    best_tk = 128
    for tk in range(128, min(2048, n_pad) + 1, 128):
        if n_pad % tk:
            continue
        adj_b = 2 * tm * tk * 2                                   # bf16, double-buffered
        hn_b = 2 * (n_pad * out_pad * 2 if hn_resident else tk * out_pad * 2)
        out_b = 2 * tm * out_pad * 4                              # f32 accumulator/output
        norm_b = 2 * tm * 128 * 4                                 # (tm, 1) lane-padded
        if adj_b + hn_b + out_b + norm_b <= _PIPELINE_BUDGET:
            best_tk = tk
    return tm, best_tk


# ---- Kernel 1: hn = (h @ W) * norm, emitted in bf16 ------------------------
def project_kernel(h_ref, w_ref, norm_ref, hn_ref):
    hw = jnp.dot(h_ref[...], w_ref[...], preferred_element_type=jnp.float32)
    # Norm scaling stays in f32 on the VPU; narrowed only on store.
    hn_ref[...] = (hw * norm_ref[...]).astype(hn_ref.dtype)


# ---- Kernel 2: out = (A @ hn) * norm ---------------------------------------
def _make_aggregate_kernel(tk, hn_resident):
    def aggregate_kernel(a_ref, hn_ref, norm_ref, out_ref):
        k = pl.program_id(1)

        @pl.when(k == 0)
        def _init():
            out_ref[...] = jnp.zeros_like(out_ref)

        if hn_resident:
            # hn is the full VMEM-resident array; slice the current k tile.
            start = pl.multiple_of(k * tk, 128)
            hn_blk = hn_ref[pl.ds(start, tk), :]
        else:
            hn_blk = hn_ref[...]

        # Accumulate directly into the f32 output block (resident across k).
        out_ref[...] += jnp.dot(a_ref[...], hn_blk,
                                preferred_element_type=jnp.float32)

        @pl.when(k == pl.num_programs(1) - 1)
        def _finalize():
            out_ref[...] = out_ref[...] * norm_ref[...]

    return aggregate_kernel


def prepare_graph(adj, norm):
    """One-time (per graph) padding + bf16 cast of graph-constant tensors."""
    n = adj.shape[0]
    n_pad = _round_up(n, 128)
    adj_bf = jnp.pad(adj, ((0, n_pad - n), (0, n_pad - n))).astype(jnp.bfloat16)
    norm_p = jnp.pad(norm, ((0, n_pad - n), (0, 0))).astype(jnp.float32)
    return adj_bf, norm_p


def egl_gcn_conv_forward(h, weight, adj_bf, norm_p):
    """Returns (h1, h2) matching EglGCNConvTest.forward (h1 == h2)."""
    n, in_feats = h.shape
    out_feats = weight.shape[1]
    n_pad = adj_bf.shape[0]

    in_pad = _round_up(in_feats, 128)    # lane-dense h loads / MXU K alignment
    out_pad = _round_up(out_feats, 128)  # lane-dense output -> unmasked vst

    # Per-call padding only touches the small O(N*in) / O(in*out) operands.
    h_bf = jnp.pad(h, ((0, n_pad - n), (0, in_pad - in_feats))).astype(jnp.bfloat16)
    w_bf = jnp.pad(weight,
                   ((0, in_pad - in_feats), (0, out_pad - out_feats))).astype(jnp.bfloat16)

    # ---- Stage 1: projection + inner norm, tiled over node rows ------------
    tm1 = _pick_tile(n_pad, 512, min_blocks=2)
    hn = pl.pallas_call(
        project_kernel,
        out_shape=jax.ShapeDtypeStruct((n_pad, out_pad), jnp.bfloat16),
        grid_spec=pltpu.PrefetchScalarGridSpec(
            num_scalar_prefetch=0,
            grid=(n_pad // tm1,),
            in_specs=[
                pl.BlockSpec((tm1, in_pad), lambda i: (i, 0)),
                pl.BlockSpec((in_pad, out_pad), lambda i: (0, 0)),
                pl.BlockSpec((tm1, 1), lambda i: (i, 0)),
            ],
            out_specs=pl.BlockSpec((tm1, out_pad), lambda i: (i, 0)),
        ),
        compiler_params=pltpu.CompilerParams(
            dimension_semantics=("parallel",),
            vmem_limit_bytes=_VMEM_LIMIT,
        ),
        cost_estimate=pl.CostEstimate(
            flops=2 * n_pad * in_pad * out_pad,
            transcendentals=0,
            bytes_accessed=(h_bf.size * 2 + w_bf.size * 2
                            + n_pad * 4 + n_pad * out_pad * 2),
        ),
    )(h_bf, w_bf, norm_p)

    # ---- Stage 2: neighbor aggregation + outer norm -------------------------
    hn_resident = n_pad * out_pad * 2 <= _HN_RESIDENT_BYTES
    tm, tk = _stage2_tiles(n_pad, out_pad, hn_resident)

    if hn_resident:
        hn_spec = pl.BlockSpec((n_pad, out_pad), lambda i, k: (0, 0))
        hn_bytes = n_pad * out_pad * 2
    else:
        hn_spec = pl.BlockSpec((tk, out_pad), lambda i, k: (k, 0))
        hn_bytes = (n_pad // tm) * n_pad * out_pad * 2

    out = pl.pallas_call(
        _make_aggregate_kernel(tk, hn_resident),
        out_shape=jax.ShapeDtypeStruct((n_pad, out_pad), jnp.float32),
        grid_spec=pltpu.PrefetchScalarGridSpec(
            num_scalar_prefetch=0,
            grid=(n_pad // tm, n_pad // tk),
            in_specs=[
                pl.BlockSpec((tm, tk), lambda i, k: (i, k)),
                hn_spec,
                pl.BlockSpec((tm, 1), lambda i, k: (i, 0)),
            ],
            out_specs=pl.BlockSpec((tm, out_pad), lambda i, k: (i, 0)),
        ),
        compiler_params=pltpu.CompilerParams(
            dimension_semantics=("parallel", "arbitrary"),
            vmem_limit_bytes=_VMEM_LIMIT,
        ),
        cost_estimate=pl.CostEstimate(
            flops=2 * n_pad * n_pad * out_pad,
            transcendentals=0,
            bytes_accessed=(adj_bf.size * 2 + hn_bytes
                            + n_pad * 4 + n_pad * out_pad * 4),
        ),
    )(adj_bf, hn, norm_p)

    out = out[:n, :out_feats]
    # dgl_compute and egl_compute produce identical results by construction.
    return out, out


if __name__ == "__main__":
    key = jax.random.PRNGKey(0)

    # Small synthetic sizes consistent with a GCN layer.
    N = 64          # number of graph nodes
    IN_FEATS = 32
    OUT_FEATS = 16

    k_feat, k_w, k_b, k_adj = jax.random.split(key, 4)

    # Node features h : (N, in_feats)
    h = jax.random.normal(k_feat, (N, IN_FEATS), dtype=jnp.float32)

    # Parameter init mirroring reset_parameters():
    #   stdv = 1 / sqrt(out_feats); weight, bias ~ U(-stdv, stdv)
    stdv = 1.0 / math.sqrt(OUT_FEATS)
    weight = jax.random.uniform(
        k_w, (IN_FEATS, OUT_FEATS), minval=-stdv, maxval=stdv, dtype=jnp.float32
    )
    bias = jax.random.uniform(  # created but unused in forward(), as in PyTorch
        k_b, (OUT_FEATS,), minval=-stdv, maxval=stdv, dtype=jnp.float32
    )
    del bias

    # Deterministic synthetic graph: random directed edges + self-loops.
    # adj[i, j] = 1.0 iff edge j -> i (message copy_src from j summed at i).
    adj = (jax.random.uniform(k_adj, (N, N)) < 0.1).astype(jnp.float32)
    adj = jnp.maximum(adj, jnp.eye(N, dtype=jnp.float32))  # self-loops

    # g.ndata['norm'] : per-node norm = in_degree^{-1/2}, shape (N, 1)
    in_deg = jnp.sum(adj, axis=1, keepdims=True)
    norm = 1.0 / jnp.sqrt(in_deg)

    # Graph-constant tensors padded/cast once (hoisted out of the hot path).
    adj_bf, norm_p = prepare_graph(adj, norm)

    fwd = jax.jit(egl_gcn_conv_forward)
    h1, h2 = fwd(h, weight, adj_bf, norm_p)
    jax.block_until_ready((h1, h2))

    # Pure-JAX f32 reference of the GCN semantics (kernel uses bf16 MXU
    # operands, so the tolerance is loosened accordingly).
    ref = (adj @ ((h @ weight) * norm)) * norm
    assert jnp.allclose(h1, ref, atol=3e-2, rtol=3e-2), "mismatch vs reference"
    assert jnp.allclose(h1, h2), "h1 != h2"

    print("KERNEL_OK")
</pallas_src>

<mosaic_0001>
module attributes {stable_mosaic.version = 11 : i64} {
  func.func @project_kernel(%arg0: i32, %arg1: memref<128x128xbf16, #tpu.memory_space<vmem>>, %arg2: memref<128x128xbf16, #tpu.memory_space<vmem>>, %arg3: memref<128x1xf32, #tpu.memory_space<vmem>>, %arg4: memref<128x128xbf16, #tpu.memory_space<vmem>>) attributes {dimension_semantics = [#tpu.dimension_semantics<parallel>], iteration_bounds = array<i64: 1>, scalar_prefetch = 0 : i64, scratch_operands = 0 : i64, tpu.core_type = #tpu.core_type<tc>, window_params = [{transform_indices = @transform_0, window_bounds = array<i64: 128, 128>}, {pipeline_mode = #tpu.pipeline_mode<synchronous>, transform_indices = @transform_1, window_bounds = array<i64: 128, 128>}, {transform_indices = @transform_2, window_bounds = array<i64: 128, 1>}, {transform_indices = @transform_3, window_bounds = array<i64: 128, 128>}]} {
    %c0 = arith.constant 0 : index
    %c0_0 = arith.constant 0 : index
    %0 = vector.load %arg1[%c0, %c0_0] : memref<128x128xbf16, #tpu.memory_space<vmem>>, vector<128x128xbf16>
    %c0_1 = arith.constant 0 : index
    %c0_2 = arith.constant 0 : index
    %1 = vector.load %arg2[%c0_1, %c0_2] : memref<128x128xbf16, #tpu.memory_space<vmem>>, vector<128x128xbf16>
    %cst = arith.constant dense<0.000000e+00> : vector<128x128xf32>
    %2 = tpu.matmul %0, %1, %cst {dimension_numbers = #tpu.dot_dimension_numbers<[1], [0], [0], [1], [0, 0, 1, 1], [], []>} : vector<128x128xbf16>, vector<128x128xbf16>, vector<128x128xf32> -> vector<128x128xf32>
    %c0_3 = arith.constant 0 : index
    %c0_4 = arith.constant 0 : index
    %3 = vector.load %arg3[%c0_3, %c0_4] : memref<128x1xf32, #tpu.memory_space<vmem>>, vector<128x1xf32>
    %4 = vector.broadcast %3 : vector<128x1xf32> to vector<128x128xf32>
    %5 = arith.mulf %2, %4 : vector<128x128xf32>
    %6 = arith.truncf %5 : vector<128x128xf32> to vector<128x128xbf16>
    %c0_5 = arith.constant 0 : index
    %c0_6 = arith.constant 0 : index
    %7 = vector.load %arg4[%c0_5, %c0_6] : memref<128x128xbf16, #tpu.memory_space<vmem>>, vector<128x128xbf16>
    tpu.vector_store %arg4[%c0_5, %c0_6], %6 {strides = array<i32>} : memref<128x128xbf16, #tpu.memory_space<vmem>>, vector<128x128xbf16>,
    return
  }
  func.func @transform_0(%arg0: i32) -> (i32, i32) {
    %c0_i32 = arith.constant 0 : i32
    %c0_i32_0 = arith.constant 0 : i32
    return %arg0, %c0_i32 : i32, i32
  }
  func.func @transform_1(%arg0: i32) -> (i32, i32) {
    %c0_i32 = arith.constant 0 : i32
    %c0_i32_0 = arith.constant 0 : i32
    %c0_i32_1 = arith.constant 0 : i32
    return %c0_i32, %c0_i32_0 : i32, i32
  }
  func.func @transform_2(%arg0: i32) -> (i32, i32) {
    %c0_i32 = arith.constant 0 : i32
    %c0_i32_0 = arith.constant 0 : i32
    return %arg0, %c0_i32 : i32, i32
  }
  func.func @transform_3(%arg0: i32) -> (i32, i32) {
    %c0_i32 = arith.constant 0 : i32
    %c0_i32_0 = arith.constant 0 : i32
    return %arg0, %c0_i32 : i32, i32
  }
}

module attributes {stable_mosaic.version = 11 : i64} {
  func.func @aggregate_kernel(%arg0: i32, %arg1: i32, %arg2: memref<128x128xbf16, #tpu.memory_space<vmem>>, %arg3: memref<128x128xbf16, #tpu.memory_space<vmem>>, %arg4: memref<128x1xf32, #tpu.memory_space<vmem>>, %arg5: memref<128x128xf32, #tpu.memory_space<vmem>>) attributes {dimension_semantics = [#tpu.dimension_semantics<parallel>, #tpu.dimension_semantics<arbitrary>], iteration_bounds = array<i64: 1, 1>, scalar_prefetch = 0 : i64, scratch_operands = 0 : i64, tpu.core_type = #tpu.core_type<tc>, window_params = [{transform_indices = @transform_0, window_bounds = array<i64: 128, 128>}, {pipeline_mode = #tpu.pipeline_mode<synchronous>, transform_indices = @transform_1, window_bounds = array<i64: 128, 128>}, {transform_indices = @transform_2, window_bounds = array<i64: 128, 1>}, {transform_indices = @transform_3, window_bounds = array<i64: 128, 128>}]} {
    %c0_i32 = arith.constant 0 : i32
    %0 = arith.cmpi eq, %arg1, %c0_i32 : i32
    %1 = arith.extui %0 : i1 to i32
    %c0_i32_0 = arith.constant 0 : i32
    %2 = arith.cmpi ne, %1, %c0_i32_0 : i32
    scf.if %2 {
      %cst_9 = arith.constant 0.000000e+00 : f32
      %15 = vector.broadcast %cst_9 : f32 to vector<128x128xf32>
      %c0_10 = arith.constant 0 : index
      %c0_11 = arith.constant 0 : index
      %16 = vector.load %arg5[%c0_10, %c0_11] : memref<128x128xf32, #tpu.memory_space<vmem>>, vector<128x128xf32>
      tpu.vector_store %arg5[%c0_10, %c0_11], %15 {strides = array<i32>} : memref<128x128xf32, #tpu.memory_space<vmem>>, vector<128x128xf32>,
    } else {
    }
    %c128_i32 = arith.constant 128 : i32
    %3 = arith.muli %arg1, %c128_i32 : i32
    %4 = tpu.assume_multiple %3, 128 : i32
    %5 = arith.index_cast %4 : i32 to index
    %c0 = arith.constant 0 : index
    %6 = vector.load %arg3[%5, %c0] : memref<128x128xbf16, #tpu.memory_space<vmem>>, vector<128x128xbf16>
    %c0_1 = arith.constant 0 : index
    %c0_2 = arith.constant 0 : index
    %7 = vector.load %arg5[%c0_1, %c0_2] : memref<128x128xf32, #tpu.memory_space<vmem>>, vector<128x128xf32>
    %c0_3 = arith.constant 0 : index
    %c0_4 = arith.constant 0 : index
    %8 = vector.load %arg2[%c0_3, %c0_4] : memref<128x128xbf16, #tpu.memory_space<vmem>>, vector<128x128xbf16>
    %cst = arith.constant dense<0.000000e+00> : vector<128x128xf32>
    %9 = tpu.matmul %8, %6, %cst {dimension_numbers = #tpu.dot_dimension_numbers<[1], [0], [0], [1], [0, 0, 1, 1], [], []>} : vector<128x128xbf16>, vector<128x128xbf16>, vector<128x128xf32> -> vector<128x128xf32>
    %10 = arith.addf %7, %9 : vector<128x128xf32>
    %c0_5 = arith.constant 0 : index
    %c0_6 = arith.constant 0 : index
    %11 = vector.load %arg5[%c0_5, %c0_6] : memref<128x128xf32, #tpu.memory_space<vmem>>, vector<128x128xf32>
    tpu.vector_store %arg5[%c0_5, %c0_6], %10 {strides = array<i32>} : memref<128x128xf32, #tpu.memory_space<vmem>>, vector<128x128xf32>,
    %c0_i32_7 = arith.constant 0 : i32
    %12 = arith.cmpi eq, %arg1, %c0_i32_7 : i32
    %13 = arith.extui %12 : i1 to i32
    %c0_i32_8 = arith.constant 0 : i32
    %14 = arith.cmpi ne, %13, %c0_i32_8 : i32
    scf.if %14 {
      %c0_9 = arith.constant 0 : index
      %c0_10 = arith.constant 0 : index
      %15 = vector.load %arg5[%c0_9, %c0_10] : memref<128x128xf32, #tpu.memory_space<vmem>>, vector<128x128xf32>
      %c0_11 = arith.constant 0 : index
      %c0_12 = arith.constant 0 : index
      %16 = vector.load %arg4[%c0_11, %c0_12] : memref<128x1xf32, #tpu.memory_space<vmem>>, vector<128x1xf32>
      %17 = vector.broadcast %16 : vector<128x1xf32> to vector<128x128xf32>
      %18 = arith.mulf %15, %17 : vector<128x128xf32>
      %c0_13 = arith.constant 0 : index
      %c0_14 = arith.constant 0 : index
      %19 = vector.load %arg5[%c0_13, %c0_14] : memref<128x128xf32, #tpu.memory_space<vmem>>, vector<128x128xf32>
      tpu.vector_store %arg5[%c0_13, %c0_14], %18 {strides = array<i32>} : memref<128x128xf32, #tpu.memory_space<vmem>>, vector<128x128xf32>,
    } else {
    }
    return
  }
  func.func @transform_0(%arg0: i32, %arg1: i32) -> (i32, i32) {
    %c0_i32 = arith.constant 0 : i32
    return %arg0, %arg1 : i32, i32
  }
  func.func @transform_1(%arg0: i32, %arg1: i32) -> (i32, i32) {
    %c0_i32 = arith.constant 0 : i32
    %c0_i32_0 = arith.constant 0 : i32
    %c0_i32_1 = arith.constant 0 : i32
    return %c0_i32, %c0_i32_0 : i32, i32
  }
  func.func @transform_2(%arg0: i32, %arg1: i32) -> (i32, i32) {
    %c0_i32 = arith.constant 0 : i32
    %c0_i32_0 = arith.constant 0 : i32
    return %arg0, %c0_i32 : i32, i32
  }
  func.func @transform_3(%arg0: i32, %arg1: i32) -> (i32, i32) {
    %c0_i32 = arith.constant 0 : i32
    %c0_i32_0 = arith.constant 0 : i32
    return %arg0, %c0_i32 : i32, i32
  }
}

</mosaic_0001>

<llo_original>
// kernel: egl_gcn_conv_forward.3
$region0: #{egl_gcn_conv_forward.3}
  #allocation0 [shape = 'u32[]', space=smem, size = 0x4, offset = 0x4, fixed_abs, tag = 'smem constant byte address 0x4 - core index']
  #allocation1 [shape = 'u32[144,128]{1,0:T(1,128)}', space=vmem, size = 0x12000, scoped, tag = 'internal scratch']
  %s0 = inlined_call_operand.vmem [shape: bf16[128,128], index: 0, kind: input, shape index: {}]
  %s1 = inlined_call_operand.vmem [shape: bf16[128,128], index: 1, kind: input, shape index: {}]
  %s2 = inlined_call_operand.vmem [shape: f32[128,1], index: 2, kind: input, shape index: {}]
  %s3 = inlined_call_operand.vmem [shape: f32[128,128], index: 3, kind: output, shape index: {}]
  %s4 = sld [smem:[#allocation0]]
  $region30: #{egl_gcn_conv_forward.3} parent=0
    _
  %s6 = ssub.s32 1, %s4
  %s7 = scalar_select 0, %s6, %s4
  // Predicated region
  $region2: #{egl_gcn_conv_forward.3} parent=0 // pred_check
    _
  $region3: #{egl_gcn_conv_forward.3} parent=0 // pred_check_branch
    %9 = sbr.rel (0) target = $region5
  $region4: #{egl_gcn_conv_forward.3} parent=0 // pred_region
    _
  $region5: #{egl_gcn_conv_forward.3} parent=0 // pred_fallthru
    _
  // Predicated region
  $region6: #{egl_gcn_conv_forward.3} parent=0 // pred_check
    _
  $region7: #{egl_gcn_conv_forward.3} parent=0 // pred_check_branch
    %11 = sbr.rel (0) target = $region9
  $region8: #{egl_gcn_conv_forward.3} parent=0 // pred_region
    _
  $region9: #{egl_gcn_conv_forward.3} parent=0 // pred_fallthru
    _
  // Predicated region
  $region10: #{egl_gcn_conv_forward.3} parent=0 // pred_check
    _
  $region11: #{egl_gcn_conv_forward.3} parent=0 // pred_check_branch
    %13 = sbr.rel (0) target = $region13
  $region12: #{egl_gcn_conv_forward.3} parent=0 // pred_region
    _
  $region13: #{egl_gcn_conv_forward.3} parent=0 // pred_fallthru
    _
  %p15 = scmp.eq.s32.totalorder 0, 0
  // Predicated region
  $region14: #{egl_gcn_conv_forward.3} parent=0 // pred_check
    %p16 = pneg %p15
  $region15: #{egl_gcn_conv_forward.3} parent=0 // pred_check_branch
    %18 = sbr.rel (%p16) target = $region17
  $region16: #{egl_gcn_conv_forward.3} parent=0 // pred_region
    %19 = vst [vmem:[%s3] sm:$0xff] 0.0
    %20 = vst [vmem:[%s3 + $0x8] sm:$0xff] 0.0
    %21 = vst [vmem:[%s3 + $0x10] sm:$0xff] 0.0
    %22 = vst [vmem:[%s3 + $0x18] sm:$0xff] 0.0
    %23 = vst [vmem:[%s3 + $0x20] sm:$0xff] 0.0
    %24 = vst [vmem:[%s3 + $0x28] sm:$0xff] 0.0
    %25 = vst [vmem:[%s3 + $0x30] sm:$0xff] 0.0
    %26 = vst [vmem:[%s3 + $0x38] sm:$0xff] 0.0
    %27 = vst [vmem:[%s3 + $0x40] sm:$0xff] 0.0
    %28 = vst [vmem:[%s3 + $0x48] sm:$0xff] 0.0
    %29 = vst [vmem:[%s3 + $0x50] sm:$0xff] 0.0
    %30 = vst [vmem:[%s3 + $0x58] sm:$0xff] 0.0
    %31 = vst [vmem:[%s3 + $0x60] sm:$0xff] 0.0
    %32 = vst [vmem:[%s3 + $0x68] sm:$0xff] 0.0
    %33 = vst [vmem:[%s3 + $0x70] sm:$0xff] 0.0
    %34 = vst [vmem:[%s3 + $0x78] sm:$0xff] 0.0
  $region17: #{egl_gcn_conv_forward.3} parent=0 // pred_fallthru
    _
  %s35 = smul.u32 0, 128
  %s36 = sshra.s32 %s35, 3
  %s37 = sand.u32 %s35, 7
  %s38 = smul.addr %s36, 4
  %s39 = scalar_lea.vmem %s1, %s38
  %v40 = vld [vmem:[%s39] sm:$0xf]
  %v41 = vld [vmem:[%s39 + $0x4] sm:$0xf]
  %v42 = vld [vmem:[%s39 + $0x8] sm:$0xf]
  %v43 = vld [vmem:[%s39 + $0xc] sm:$0xf]
  %v44 = vld [vmem:[%s39 + $0x10] sm:$0xf]
  %v45 = vld [vmem:[%s39 + $0x14] sm:$0xf]
  %v46 = vld [vmem:[%s39 + $0x18] sm:$0xf]
  %v47 = vld [vmem:[%s39 + $0x1c] sm:$0xf]
  %v48 = vld [vmem:[%s39 + $0x20] sm:$0xf]
  %v49 = vld [vmem:[%s39 + $0x24] sm:$0xf]
  %v50 = vld [vmem:[%s39 + $0x28] sm:$0xf]
  %v51 = vld [vmem:[%s39 + $0x2c] sm:$0xf]
  %v52 = vld [vmem:[%s39 + $0x30] sm:$0xf]
  %v53 = vld [vmem:[%s39 + $0x34] sm:$0xf]
  %v54 = vld [vmem:[%s39 + $0x38] sm:$0xf]
  %v55 = vld [vmem:[%s39 + $0x3c] sm:$0xf]
  %v56 = vld [vmem:[%s3] sm:$0xff]
  %v57 = vld [vmem:[%s3 + $0x8] sm:$0xff]
  %v58 = vld [vmem:[%s3 + $0x10] sm:$0xff]
  %v59 = vld [vmem:[%s3 + $0x18] sm:$0xff]
  %v60 = vld [vmem:[%s3 + $0x20] sm:$0xff]
  %v61 = vld [vmem:[%s3 + $0x28] sm:$0xff]
  %v62 = vld [vmem:[%s3 + $0x30] sm:$0xff]
  %v63 = vld [vmem:[%s3 + $0x38] sm:$0xff]
  %v64 = vld [vmem:[%s3 + $0x40] sm:$0xff]
  %v65 = vld [vmem:[%s3 + $0x48] sm:$0xff]
  %v66 = vld [vmem:[%s3 + $0x50] sm:$0xff]
  %v67 = vld [vmem:[%s3 + $0x58] sm:$0xff]
  %v68 = vld [vmem:[%s3 + $0x60] sm:$0xff]
  %v69 = vld [vmem:[%s3 + $0x68] sm:$0xff]
  %v70 = vld [vmem:[%s3 + $0x70] sm:$0xff]
  %v71 = vld [vmem:[%s3 + $0x78] sm:$0xff]
  %v72 = vld [vmem:[%s0] sm:$0xf]
  %v73 = vld [vmem:[%s0 + $0x4] sm:$0xf]
  %v74 = vld [vmem:[%s0 + $0x8] sm:$0xf]
  %v75 = vld [vmem:[%s0 + $0xc] sm:$0xf]
  %v76 = vld [vmem:[%s0 + $0x10] sm:$0xf]
  %v77 = vld [vmem:[%s0 + $0x14] sm:$0xf]
  %v78 = vld [vmem:[%s0 + $0x18] sm:$0xf]
  %v79 = vld [vmem:[%s0 + $0x1c] sm:$0xf]
  %v80 = vld [vmem:[%s0 + $0x20] sm:$0xf]
  %v81 = vld [vmem:[%s0 + $0x24] sm:$0xf]
  %v82 = vld [vmem:[%s0 + $0x28] sm:$0xf]
  %v83 = vld [vmem:[%s0 + $0x2c] sm:$0xf]
  %v84 = vld [vmem:[%s0 + $0x30] sm:$0xf]
  %v85 = vld [vmem:[%s0 + $0x34] sm:$0xf]
  %v86 = vld [vmem:[%s0 + $0x38] sm:$0xf]
  %v87 = vld [vmem:[%s0 + $0x3c] sm:$0xf]
  %v104 = vunpack.c.l.b16 %v72
  %v105 = vunpack.c.l.b16 %v73
  %v106 = vunpack.c.l.b16 %v74
  %v107 = vunpack.c.l.b16 %v75
  %v108 = vunpack.c.l.b16 %v76
  %v109 = vunpack.c.l.b16 %v77
  %v110 = vunpack.c.l.b16 %v78
  %v111 = vunpack.c.l.b16 %v79
  %v112 = vunpack.c.l.b16 %v80
  %v113 = vunpack.c.l.b16 %v81
  %v114 = vunpack.c.l.b16 %v82
  %v115 = vunpack.c.l.b16 %v83
  %v116 = vunpack.c.l.b16 %v84
  %v117 = vunpack.c.l.b16 %v85
  %v118 = vunpack.c.l.b16 %v86
  %v119 = vunpack.c.l.b16 %v87
  %v120 = vpack.c.b16 %v105, %v104
  %v121 = vpack.c.b16 %v107, %v106
  %v122 = vpack.c.b16 %v109, %v108
  %v123 = vpack.c.b16 %v111, %v110
  %v124 = vpack.c.b16 %v113, %v112
  %v125 = vpack.c.b16 %v115, %v114
  %v126 = vpack.c.b16 %v117, %v116
  %v127 = vpack.c.b16 %v119, %v118
  %v152 = vunpack.c.l.b16 %v40
  %v153 = vunpack.c.l.b16 %v41
  %v154 = vunpack.c.l.b16 %v42
  %v155 = vunpack.c.l.b16 %v43
  %v156 = vunpack.c.l.b16 %v44
  %v157 = vunpack.c.l.b16 %v45
  %v158 = vunpack.c.l.b16 %v46
  %v159 = vunpack.c.l.b16 %v47
  %v160 = vunpack.c.l.b16 %v48
  %v161 = vunpack.c.l.b16 %v49
  %v162 = vunpack.c.l.b16 %v50
  %v163 = vunpack.c.l.b16 %v51
  %v164 = vunpack.c.l.b16 %v52
  %v165 = vunpack.c.l.b16 %v53
  %v166 = vunpack.c.l.b16 %v54
  %v167 = vunpack.c.l.b16 %v55
  %v168 = vpack.c.b16 %v153, %v152
  %v169 = vpack.c.b16 %v155, %v154
  %v170 = vpack.c.b16 %v157, %v156
  %v171 = vpack.c.b16 %v159, %v158
  %v172 = vpack.c.b16 %v161, %v160
  %v173 = vpack.c.b16 %v163, %v162
  %v174 = vpack.c.b16 %v165, %v164
  %v175 = vpack.c.b16 %v167, %v166
  %184 = vmatprep.subr.bf16.mxu0 0
  %185 = vmatpush1.bf16.msra.mxu0 %v175
  %186 = vmatprep.subr.bf16.mxu0 0
  %187 = vmatpush1.bf16.msra.mxu0 %v174
  %188 = vmatprep.subr.bf16.mxu0 0
  %189 = vmatpush1.bf16.msra.mxu0 %v173
  %190 = vmatprep.subr.bf16.mxu0 0
  %191 = vmatpush1.bf16.msra.mxu0 %v172
  %192 = vmatprep.subr.bf16.mxu0 0
  %193 = vmatpush1.bf16.msra.mxu0 %v171
  %194 = vmatprep.subr.bf16.mxu0 0
  %195 = vmatpush1.bf16.msra.mxu0 %v170
  %196 = vmatprep.subr.bf16.mxu0 0
  %197 = vmatpush1.bf16.msra.mxu0 %v169
  %198 = vmatprep.subr.bf16.mxu0 0
  %199 = vmatpush1.bf16.msra.mxu0 %v168
  %200 = vmatprep.subr.bf16.mxu0 0
  %201 = vmatpush2.bf16.msra.mxu0 0
  %202 = vmatprep.subr.bf16.mxu0 0
  %203 = vmatpush2.bf16.msra.mxu0 0
  %204 = vmatprep.subr.bf16.mxu0 0
  %205 = vmatpush2.bf16.msra.mxu0 0
  %206 = vmatprep.subr.bf16.mxu0 0
  %207 = vmatpush2.bf16.msra.mxu0 0
  %208 = vmatprep.subr.bf16.mxu0 0
  %209 = vmatpush2.bf16.msra.mxu0 0
  %210 = vmatprep.subr.bf16.mxu0 0
  %211 = vmatpush2.bf16.msra.mxu0 0
  %212 = vmatprep.subr.bf16.mxu0 0
  %213 = vmatpush2.bf16.msra.mxu0 0
  %214 = vmatprep.subr.bf16.mxu0 0
  %215 = vmatpush2.bf16.msra.mxu0 0
  %216 = vmatprep.mubr.bf16.mxu0 0
  %217 = vmatmul.mubr.bf16.gmra.mxu0 %v120
  %v218 = vpop.f32.mrf.mxu0
  %v219 = vadd.f32 0.0, %v218
  %v220 = vpop.f32.mrf.mxu0
  %v221 = vpop.f32.mrf.mxu0
  %v222 = vadd.f32 0.0, %v221
  %v223 = vpop.f32.mrf.mxu0
  %224 = vmatprep.mubr.bf16.mxu0 0
  %225 = vmatmul.mubr.bf16.gmra.mxu0 %v121
  %v226 = vpop.f32.mrf.mxu0
  %v227 = vadd.f32 0.0, %v226
  %v228 = vpop.f32.mrf.mxu0
  %v229 = vpop.f32.mrf.mxu0
  %v230 = vadd.f32 0.0, %v229
  %v231 = vpop.f32.mrf.mxu0
  %232 = vmatprep.mubr.bf16.mxu0 0
  %233 = vmatmul.mubr.bf16.gmra.mxu0 %v122
  %v234 = vpop.f32.mrf.mxu0
  %v235 = vadd.f32 0.0, %v234
  %v236 = vpop.f32.mrf.mxu0
  %v237 = vpop.f32.mrf.mxu0
  %v238 = vadd.f32 0.0, %v237
  %v239 = vpop.f32.mrf.mxu0
  %240 = vmatprep.mubr.bf16.mxu0 0
  %241 = vmatmul.mubr.bf16.gmra.mxu0 %v123
  %v242 = vpop.f32.mrf.mxu0
  %v243 = vadd.f32 0.0, %v242
  %v244 = vpop.f32.mrf.mxu0
  %v245 = vpop.f32.mrf.mxu0
  %v246 = vadd.f32 0.0, %v245
  %v247 = vpop.f32.mrf.mxu0
  %248 = vmatprep.mubr.bf16.mxu0 0
  %249 = vmatmul.mubr.bf16.gmra.mxu0 %v124
  %v250 = vpop.f32.mrf.mxu0
  %v251 = vadd.f32 0.0, %v250
  %v252 = vpop.f32.mrf.mxu0
  %v253 = vpop.f32.mrf.mxu0
  %v254 = vadd.f32 0.0, %v253
  %v255 = vpop.f32.mrf.mxu0
  %256 = vmatprep.mubr.bf16.mxu0 0
  %257 = vmatmul.mubr.bf16.gmra.mxu0 %v125
  %v258 = vpop.f32.mrf.mxu0
  %v259 = vadd.f32 0.0, %v258
  %v260 = vpop.f32.mrf.mxu0
  %v261 = vpop.f32.mrf.mxu0
  %v262 = vadd.f32 0.0, %v261
  %v263 = vpop.f32.mrf.mxu0
  %264 = vmatprep.mubr.bf16.mxu0 0
  %265 = vmatmul.mubr.bf16.gmra.mxu0 %v126
  %v266 = vpop.f32.mrf.mxu0
  %v267 = vadd.f32 0.0, %v266
  %v268 = vpop.f32.mrf.mxu0
  %v269 = vpop.f32.mrf.mxu0
  %v270 = vadd.f32 0.0, %v269
  %v271 = vpop.f32.mrf.mxu0
  %272 = vmatprep.mubr.bf16.mxu0 0
  %273 = vmatmul.mubr.bf16.gmra.mxu0 %v127
  %v274 = vpop.f32.mrf.mxu0
  %v275 = vadd.f32 0.0, %v274
  %v276 = vpop.f32.mrf.mxu0
  %v277 = vpop.f32.mrf.mxu0
  %v278 = vadd.f32 0.0, %v277
  %v279 = vpop.f32.mrf.mxu0
  %280 = vdwg.mxu0
  %v281 = vadd.f32 %v56, %v219
  %v282 = vadd.f32 %v57, %v222
  %v283 = vadd.f32 %v58, %v227
  %v284 = vadd.f32 %v59, %v230
  %v285 = vadd.f32 %v60, %v235
  %v286 = vadd.f32 %v61, %v238
  %v287 = vadd.f32 %v62, %v243
  %v288 = vadd.f32 %v63, %v246
  %v289 = vadd.f32 %v64, %v251
  %v290 = vadd.f32 %v65, %v254
  %v291 = vadd.f32 %v66, %v259
  %v292 = vadd.f32 %v67, %v262
  %v293 = vadd.f32 %v68, %v267
  %v294 = vadd.f32 %v69, %v270
  %v295 = vadd.f32 %v70, %v275
  %v296 = vadd.f32 %v71, %v278
  %297 = vst [vmem:[%s3] sm:$0xff] %v281
  %298 = vst [vmem:[%s3 + $0x8] sm:$0xff] %v282
  %299 = vst [vmem:[%s3 + $0x10] sm:$0xff] %v283
  %300 = vst [vmem:[%s3 + $0x18] sm:$0xff] %v284
  %301 = vst [vmem:[%s3 + $0x20] sm:$0xff] %v285
  %302 = vst [vmem:[%s3 + $0x28] sm:$0xff] %v286
  %303 = vst [vmem:[%s3 + $0x30] sm:$0xff] %v287
  %304 = vst [vmem:[%s3 + $0x38] sm:$0xff] %v288
  %305 = vst [vmem:[%s3 + $0x40] sm:$0xff] %v289
  %306 = vst [vmem:[%s3 + $0x48] sm:$0xff] %v290
  %307 = vst [vmem:[%s3 + $0x50] sm:$0xff] %v291
  %308 = vst [vmem:[%s3 + $0x58] sm:$0xff] %v292
  %309 = vst [vmem:[%s3 + $0x60] sm:$0xff] %v293
  %310 = vst [vmem:[%s3 + $0x68] sm:$0xff] %v294
  %311 = vst [vmem:[%s3 + $0x70] sm:$0xff] %v295
  %312 = vst [vmem:[%s3 + $0x78] sm:$0xff] %v296
  // Predicated region
  $region18: #{egl_gcn_conv_forward.3} parent=0 // pred_check
    %p313 = pneg %p15
  $region19: #{egl_gcn_conv_forward.3} parent=0 // pred_check_branch
    %315 = sbr.rel (%p313) target = $region21
  $region20: #{egl_gcn_conv_forward.3} parent=0 // pred_region
    %v316 = vld [vmem:[%s3] sm:$0xff]
    %v317 = vld [vmem:[%s3 + $0x8] sm:$0xff]
    %v318 = vld [vmem:[%s3 + $0x10] sm:$0xff]
    %v319 = vld [vmem:[%s3 + $0x18] sm:$0xff]
    %v320 = vld [vmem:[%s3 + $0x20] sm:$0xff]
    %v321 = vld [vmem:[%s3 + $0x28] sm:$0xff]
    %v322 = vld [vmem:[%s3 + $0x30] sm:$0xff]
    %v323 = vld [vmem:[%s3 + $0x38] sm:$0xff]
    %v324 = vld [vmem:[%s3 + $0x40] sm:$0xff]
    %v325 = vld [vmem:[%s3 + $0x48] sm:$0xff]
    %v326 = vld [vmem:[%s3 + $0x50] sm:$0xff]
    %v327 = vld [vmem:[%s3 + $0x58] sm:$0xff]
    %v328 = vld [vmem:[%s3 + $0x60] sm:$0xff]
    %v329 = vld [vmem:[%s3 + $0x68] sm:$0xff]
    %v330 = vld [vmem:[%s3 + $0x70] sm:$0xff]
    %v331 = vld [vmem:[%s3 + $0x78] sm:$0xff]
    %v332 = vld [vmem:[%s2] sm:$0xff]
    %v333 = vld [vmem:[%s2 + $0x8] sm:$0xff]
    %v334 = vld [vmem:[%s2 + $0x10] sm:$0xff]
    %v335 = vld [vmem:[%s2 + $0x18] sm:$0xff]
    %v336 = vld [vmem:[%s2 + $0x20] sm:$0xff]
    %v337 = vld [vmem:[%s2 + $0x28] sm:$0xff]
    %v338 = vld [vmem:[%s2 + $0x30] sm:$0xff]
    %v339 = vld [vmem:[%s2 + $0x38] sm:$0xff]
    %v340 = vld [vmem:[%s2 + $0x40] sm:$0xff]
    %v341 = vld [vmem:[%s2 + $0x48] sm:$0xff]
    %v342 = vld [vmem:[%s2 + $0x50] sm:$0xff]
    %v343 = vld [vmem:[%s2 + $0x58] sm:$0xff]
    %v344 = vld [vmem:[%s2 + $0x60] sm:$0xff]
    %v345 = vld [vmem:[%s2 + $0x68] sm:$0xff]
    %v346 = vld [vmem:[%s2 + $0x70] sm:$0xff]
    %v347 = vld [vmem:[%s2 + $0x78] sm:$0xff]
    %349 = vset.pattern.permute.xlu0 0
    %350 = vperm.xlu0 %349, %v332
    %v351 = vpop.permute.xlu0 %350
    %354 = vset.pattern.permute.xlu0 0
    %355 = vperm.xlu0 %354, %v333
    %v356 = vpop.permute.xlu0 %355
    %359 = vset.pattern.permute.xlu0 0
    %360 = vperm.xlu0 %359, %v334
    %v361 = vpop.permute.xlu0 %360
    %364 = vset.pattern.permute.xlu0 0
    %365 = vperm.xlu0 %364, %v335
    %v366 = vpop.permute.xlu0 %365
    %369 = vset.pattern.permute.xlu0 0
    %370 = vperm.xlu0 %369, %v336
    %v371 = vpop.permute.xlu0 %370
    %374 = vset.pattern.permute.xlu0 0
    %375 = vperm.xlu0 %374, %v337
    %v376 = vpop.permute.xlu0 %375
    %379 = vset.pattern.permute.xlu0 0
    %380 = vperm.xlu0 %379, %v338
    %v381 = vpop.permute.xlu0 %380
    %384 = vset.pattern.permute.xlu0 0
    %385 = vperm.xlu0 %384, %v339
    %v386 = vpop.permute.xlu0 %385
    %389 = vset.pattern.permute.xlu0 0
    %390 = vperm.xlu0 %389, %v340
    %v391 = vpop.permute.xlu0 %390
    %394 = vset.pattern.permute.xlu0 0
    %395 = vperm.xlu0 %394, %v341
    %v396 = vpop.permute.xlu0 %395
    %399 = vset.pattern.permute.xlu0 0
    %400 = vperm.xlu0 %399, %v342
    %v401 = vpop.permute.xlu0 %400
    %404 = vset.pattern.permute.xlu0 0
    %405 = vperm.xlu0 %404, %v343
    %v406 = vpop.permute.xlu0 %405
    %409 = vset.pattern.permute.xlu0 0
    %410 = vperm.xlu0 %409, %v344
    %v411 = vpop.permute.xlu0 %410
    %414 = vset.pattern.permute.xlu0 0
    %415 = vperm.xlu0 %414, %v345
    %v416 = vpop.permute.xlu0 %415
    %419 = vset.pattern.permute.xlu0 0
    %420 = vperm.xlu0 %419, %v346
    %v421 = vpop.permute.xlu0 %420
    %424 = vset.pattern.permute.xlu0 0
    %425 = vperm.xlu0 %424, %v347
    %v426 = vpop.permute.xlu0 %425
    %v428 = vmul.f32 %v316, %v351
    %v429 = vmul.f32 %v317, %v356
    %v430 = vmul.f32 %v318, %v361
    %v431 = vmul.f32 %v319, %v366
    %v432 = vmul.f32 %v320, %v371
    %v433 = vmul.f32 %v321, %v376
    %v434 = vmul.f32 %v322, %v381
    %v435 = vmul.f32 %v323, %v386
    %v436 = vmul.f32 %v324, %v391
    %v437 = vmul.f32 %v325, %v396
    %v438 = vmul.f32 %v326, %v401
    %v439 = vmul.f32 %v327, %v406
    %v440 = vmul.f32 %v328, %v411
    %v441 = vmul.f32 %v329, %v416
    %v442 = vmul.f32 %v330, %v421
    %v443 = vmul.f32 %v331, %v426
    %444 = vst [vmem:[%s3] sm:$0xff] %v428
    %445 = vst [vmem:[%s3 + $0x8] sm:$0xff] %v429
    %446 = vst [vmem:[%s3 + $0x10] sm:$0xff] %v430
    %447 = vst [vmem:[%s3 + $0x18] sm:$0xff] %v431
    %448 = vst [vmem:[%s3 + $0x20] sm:$0xff] %v432
    %449 = vst [vmem:[%s3 + $0x28] sm:$0xff] %v433
    %450 = vst [vmem:[%s3 + $0x30] sm:$0xff] %v434
    %451 = vst [vmem:[%s3 + $0x38] sm:$0xff] %v435
    %452 = vst [vmem:[%s3 + $0x40] sm:$0xff] %v436
    %453 = vst [vmem:[%s3 + $0x48] sm:$0xff] %v437
    %454 = vst [vmem:[%s3 + $0x50] sm:$0xff] %v438
    %455 = vst [vmem:[%s3 + $0x58] sm:$0xff] %v439
    %456 = vst [vmem:[%s3 + $0x60] sm:$0xff] %v440
    %457 = vst [vmem:[%s3 + $0x68] sm:$0xff] %v441
    %458 = vst [vmem:[%s3 + $0x70] sm:$0xff] %v442
    %459 = vst [vmem:[%s3 + $0x78] sm:$0xff] %v443
  $region21: #{egl_gcn_conv_forward.3} parent=0 // pred_fallthru
    _
  // Predicated region
  $region22: #{egl_gcn_conv_forward.3} parent=0 // pred_check
    _
  $region23: #{egl_gcn_conv_forward.3} parent=0 // pred_check_branch
    %461 = sbr.rel (0) target = $region25
  $region24: #{egl_gcn_conv_forward.3} parent=0 // pred_region
    _
  $region25: #{egl_gcn_conv_forward.3} parent=0 // pred_fallthru
    _
  // Predicated region
  $region26: #{egl_gcn_conv_forward.3} parent=0 // pred_check
    _
  $region27: #{egl_gcn_conv_forward.3} parent=0 // pred_check_branch
    %463 = sbr.rel (0) target = $region29
  $region28: #{egl_gcn_conv_forward.3} parent=0 // pred_region
    _
  $region29: #{egl_gcn_conv_forward.3} parent=0 // pred_fallthru
    _

// kernel: egl_gcn_conv_forward.2
$region0: #{egl_gcn_conv_forward.2}
  #allocation0 [shape = 'u32[]', space=smem, size = 0x4, offset = 0x4, fixed_abs, tag = 'smem constant byte address 0x4 - core index']
  #allocation1 [shape = 'u32[144,128]{1,0:T(1,128)}', space=vmem, size = 0x12000, scoped, tag = 'internal scratch']
  %s0 = inlined_call_operand.vmem [shape: bf16[128,128], index: 0, kind: input, shape index: {}]
  %s1 = inlined_call_operand.vmem [shape: bf16[128,128], index: 1, kind: input, shape index: {}]
  %s2 = inlined_call_operand.vmem [shape: f32[128,1], index: 2, kind: input, shape index: {}]
  %s3 = inlined_call_operand.vmem [shape: bf16[128,128], index: 3, kind: output, shape index: {}]
  %s4 = sld [smem:[#allocation0]]
  $region22: #{egl_gcn_conv_forward.2} parent=0
    _
  %s6 = ssub.s32 1, %s4
  %s7 = scalar_select 0, %s6, %s4
  // Predicated region
  $region2: #{egl_gcn_conv_forward.2} parent=0 // pred_check
    _
  $region3: #{egl_gcn_conv_forward.2} parent=0 // pred_check_branch
    %9 = sbr.rel (0) target = $region5
  $region4: #{egl_gcn_conv_forward.2} parent=0 // pred_region
    _
  $region5: #{egl_gcn_conv_forward.2} parent=0 // pred_fallthru
    _
  // Predicated region
  $region6: #{egl_gcn_conv_forward.2} parent=0 // pred_check
    _
  $region7: #{egl_gcn_conv_forward.2} parent=0 // pred_check_branch
    %11 = sbr.rel (0) target = $region9
  $region8: #{egl_gcn_conv_forward.2} parent=0 // pred_region
    _
  $region9: #{egl_gcn_conv_forward.2} parent=0 // pred_fallthru
    _
  // Predicated region
  $region10: #{egl_gcn_conv_forward.2} parent=0 // pred_check
    _
  $region11: #{egl_gcn_conv_forward.2} parent=0 // pred_check_branch
    %13 = sbr.rel (0) target = $region13
  $region12: #{egl_gcn_conv_forward.2} parent=0 // pred_region
    _
  $region13: #{egl_gcn_conv_forward.2} parent=0 // pred_fallthru
    _
  %v15 = vld [vmem:[%s0] sm:$0xf]
  %v16 = vld [vmem:[%s0 + $0x4] sm:$0xf]
  %v17 = vld [vmem:[%s0 + $0x8] sm:$0xf]
  %v18 = vld [vmem:[%s0 + $0xc] sm:$0xf]
  %v19 = vld [vmem:[%s0 + $0x10] sm:$0xf]
  %v20 = vld [vmem:[%s0 + $0x14] sm:$0xf]
  %v21 = vld [vmem:[%s0 + $0x18] sm:$0xf]
  %v22 = vld [vmem:[%s0 + $0x1c] sm:$0xf]
  %v23 = vld [vmem:[%s0 + $0x20] sm:$0xf]
  %v24 = vld [vmem:[%s0 + $0x24] sm:$0xf]
  %v25 = vld [vmem:[%s0 + $0x28] sm:$0xf]
  %v26 = vld [vmem:[%s0 + $0x2c] sm:$0xf]
  %v27 = vld [vmem:[%s0 + $0x30] sm:$0xf]
  %v28 = vld [vmem:[%s0 + $0x34] sm:$0xf]
  %v29 = vld [vmem:[%s0 + $0x38] sm:$0xf]
  %v30 = vld [vmem:[%s0 + $0x3c] sm:$0xf]
  %v31 = vld [vmem:[%s1] sm:$0xf]
  %v32 = vld [vmem:[%s1 + $0x4] sm:$0xf]
  %v33 = vld [vmem:[%s1 + $0x8] sm:$0xf]
  %v34 = vld [vmem:[%s1 + $0xc] sm:$0xf]
  %v35 = vld [vmem:[%s1 + $0x10] sm:$0xf]
  %v36 = vld [vmem:[%s1 + $0x14] sm:$0xf]
  %v37 = vld [vmem:[%s1 + $0x18] sm:$0xf]
  %v38 = vld [vmem:[%s1 + $0x1c] sm:$0xf]
  %v39 = vld [vmem:[%s1 + $0x20] sm:$0xf]
  %v40 = vld [vmem:[%s1 + $0x24] sm:$0xf]
  %v41 = vld [vmem:[%s1 + $0x28] sm:$0xf]
  %v42 = vld [vmem:[%s1 + $0x2c] sm:$0xf]
  %v43 = vld [vmem:[%s1 + $0x30] sm:$0xf]
  %v44 = vld [vmem:[%s1 + $0x34] sm:$0xf]
  %v45 = vld [vmem:[%s1 + $0x38] sm:$0xf]
  %v46 = vld [vmem:[%s1 + $0x3c] sm:$0xf]
  %v63 = vunpack.c.l.b16 %v15
  %v64 = vunpack.c.l.b16 %v16
  %v65 = vunpack.c.l.b16 %v17
  %v66 = vunpack.c.l.b16 %v18
  %v67 = vunpack.c.l.b16 %v19
  %v68 = vunpack.c.l.b16 %v20
  %v69 = vunpack.c.l.b16 %v21
  %v70 = vunpack.c.l.b16 %v22
  %v71 = vunpack.c.l.b16 %v23
  %v72 = vunpack.c.l.b16 %v24
  %v73 = vunpack.c.l.b16 %v25
  %v74 = vunpack.c.l.b16 %v26
  %v75 = vunpack.c.l.b16 %v27
  %v76 = vunpack.c.l.b16 %v28
  %v77 = vunpack.c.l.b16 %v29
  %v78 = vunpack.c.l.b16 %v30
  %v79 = vpack.c.b16 %v64, %v63
  %v80 = vpack.c.b16 %v66, %v65
  %v81 = vpack.c.b16 %v68, %v67
  %v82 = vpack.c.b16 %v70, %v69
  %v83 = vpack.c.b16 %v72, %v71
  %v84 = vpack.c.b16 %v74, %v73
  %v85 = vpack.c.b16 %v76, %v75
  %v86 = vpack.c.b16 %v78, %v77
  %v111 = vunpack.c.l.b16 %v31
  %v112 = vunpack.c.l.b16 %v32
  %v113 = vunpack.c.l.b16 %v33
  %v114 = vunpack.c.l.b16 %v34
  %v115 = vunpack.c.l.b16 %v35
  %v116 = vunpack.c.l.b16 %v36
  %v117 = vunpack.c.l.b16 %v37
  %v118 = vunpack.c.l.b16 %v38
  %v119 = vunpack.c.l.b16 %v39
  %v120 = vunpack.c.l.b16 %v40
  %v121 = vunpack.c.l.b16 %v41
  %v122 = vunpack.c.l.b16 %v42
  %v123 = vunpack.c.l.b16 %v43
  %v124 = vunpack.c.l.b16 %v44
  %v125 = vunpack.c.l.b16 %v45
  %v126 = vunpack.c.l.b16 %v46
  %v127 = vpack.c.b16 %v112, %v111
  %v128 = vpack.c.b16 %v114, %v113
  %v129 = vpack.c.b16 %v116, %v115
  %v130 = vpack.c.b16 %v118, %v117
  %v131 = vpack.c.b16 %v120, %v119
  %v132 = vpack.c.b16 %v122, %v121
  %v133 = vpack.c.b16 %v124, %v123
  %v134 = vpack.c.b16 %v126, %v125
  %143 = vmatprep.subr.bf16.mxu0 0
  %144 = vmatpush1.bf16.msra.mxu0 %v134
  %145 = vmatprep.subr.bf16.mxu0 0
  %146 = vmatpush1.bf16.msra.mxu0 %v133
  %147 = vmatprep.subr.bf16.mxu0 0
  %148 = vmatpush1.bf16.msra.mxu0 %v132
  %149 = vmatprep.subr.bf16.mxu0 0
  %150 = vmatpush1.bf16.msra.mxu0 %v131
  %151 = vmatprep.subr.bf16.mxu0 0
  %152 = vmatpush1.bf16.msra.mxu0 %v130
  %153 = vmatprep.subr.bf16.mxu0 0
  %154 = vmatpush1.bf16.msra.mxu0 %v129
  %155 = vmatprep.subr.bf16.mxu0 0
  %156 = vmatpush1.bf16.msra.mxu0 %v128
  %157 = vmatprep.subr.bf16.mxu0 0
  %158 = vmatpush1.bf16.msra.mxu0 %v127
  %159 = vmatprep.subr.bf16.mxu0 0
  %160 = vmatpush2.bf16.msra.mxu0 0
  %161 = vmatprep.subr.bf16.mxu0 0
  %162 = vmatpush2.bf16.msra.mxu0 0
  %163 = vmatprep.subr.bf16.mxu0 0
  %164 = vmatpush2.bf16.msra.mxu0 0
  %165 = vmatprep.subr.bf16.mxu0 0
  %166 = vmatpush2.bf16.msra.mxu0 0
  %167 = vmatprep.subr.bf16.mxu0 0
  %168 = vmatpush2.bf16.msra.mxu0 0
  %169 = vmatprep.subr.bf16.mxu0 0
  %170 = vmatpush2.bf16.msra.mxu0 0
  %171 = vmatprep.subr.bf16.mxu0 0
  %172 = vmatpush2.bf16.msra.mxu0 0
  %173 = vmatprep.subr.bf16.mxu0 0
  %174 = vmatpush2.bf16.msra.mxu0 0
  %175 = vmatprep.mubr.bf16.mxu0 0
  %176 = vmatmul.mubr.bf16.gmra.mxu0 %v79
  %v177 = vpop.f32.mrf.mxu0
  %v178 = vadd.f32 0.0, %v177
  %v179 = vpop.f32.mrf.mxu0
  %v180 = vpop.f32.mrf.mxu0
  %v181 = vadd.f32 0.0, %v180
  %v182 = vpop.f32.mrf.mxu0
  %183 = vmatprep.mubr.bf16.mxu0 0
  %184 = vmatmul.mubr.bf16.gmra.mxu0 %v80
  %v185 = vpop.f32.mrf.mxu0
  %v186 = vadd.f32 0.0, %v185
  %v187 = vpop.f32.mrf.mxu0
  %v188 = vpop.f32.mrf.mxu0
  %v189 = vadd.f32 0.0, %v188
  %v190 = vpop.f32.mrf.mxu0
  %191 = vmatprep.mubr.bf16.mxu0 0
  %192 = vmatmul.mubr.bf16.gmra.mxu0 %v81
  %v193 = vpop.f32.mrf.mxu0
  %v194 = vadd.f32 0.0, %v193
  %v195 = vpop.f32.mrf.mxu0
  %v196 = vpop.f32.mrf.mxu0
  %v197 = vadd.f32 0.0, %v196
  %v198 = vpop.f32.mrf.mxu0
  %199 = vmatprep.mubr.bf16.mxu0 0
  %200 = vmatmul.mubr.bf16.gmra.mxu0 %v82
  %v201 = vpop.f32.mrf.mxu0
  %v202 = vadd.f32 0.0, %v201
  %v203 = vpop.f32.mrf.mxu0
  %v204 = vpop.f32.mrf.mxu0
  %v205 = vadd.f32 0.0, %v204
  %v206 = vpop.f32.mrf.mxu0
  %207 = vmatprep.mubr.bf16.mxu0 0
  %208 = vmatmul.mubr.bf16.gmra.mxu0 %v83
  %v209 = vpop.f32.mrf.mxu0
  %v210 = vadd.f32 0.0, %v209
  %v211 = vpop.f32.mrf.mxu0
  %v212 = vpop.f32.mrf.mxu0
  %v213 = vadd.f32 0.0, %v212
  %v214 = vpop.f32.mrf.mxu0
  %215 = vmatprep.mubr.bf16.mxu0 0
  %216 = vmatmul.mubr.bf16.gmra.mxu0 %v84
  %v217 = vpop.f32.mrf.mxu0
  %v218 = vadd.f32 0.0, %v217
  %v219 = vpop.f32.mrf.mxu0
  %v220 = vpop.f32.mrf.mxu0
  %v221 = vadd.f32 0.0, %v220
  %v222 = vpop.f32.mrf.mxu0
  %223 = vmatprep.mubr.bf16.mxu0 0
  %224 = vmatmul.mubr.bf16.gmra.mxu0 %v85
  %v225 = vpop.f32.mrf.mxu0
  %v226 = vadd.f32 0.0, %v225
  %v227 = vpop.f32.mrf.mxu0
  %v228 = vpop.f32.mrf.mxu0
  %v229 = vadd.f32 0.0, %v228
  %v230 = vpop.f32.mrf.mxu0
  %231 = vmatprep.mubr.bf16.mxu0 0
  %232 = vmatmul.mubr.bf16.gmra.mxu0 %v86
  %v233 = vpop.f32.mrf.mxu0
  %v234 = vadd.f32 0.0, %v233
  %v235 = vpop.f32.mrf.mxu0
  %v236 = vpop.f32.mrf.mxu0
  %v237 = vadd.f32 0.0, %v236
  %v238 = vpop.f32.mrf.mxu0
  %239 = vdwg.mxu0
  %v240 = vld [vmem:[%s2] sm:$0xff]
  %v241 = vld [vmem:[%s2 + $0x8] sm:$0xff]
  %v242 = vld [vmem:[%s2 + $0x10] sm:$0xff]
  %v243 = vld [vmem:[%s2 + $0x18] sm:$0xff]
  %v244 = vld [vmem:[%s2 + $0x20] sm:$0xff]
  %v245 = vld [vmem:[%s2 + $0x28] sm:$0xff]
  %v246 = vld [vmem:[%s2 + $0x30] sm:$0xff]
  %v247 = vld [vmem:[%s2 + $0x38] sm:$0xff]
  %v248 = vld [vmem:[%s2 + $0x40] sm:$0xff]
  %v249 = vld [vmem:[%s2 + $0x48] sm:$0xff]
  %v250 = vld [vmem:[%s2 + $0x50] sm:$0xff]
  %v251 = vld [vmem:[%s2 + $0x58] sm:$0xff]
  %v252 = vld [vmem:[%s2 + $0x60] sm:$0xff]
  %v253 = vld [vmem:[%s2 + $0x68] sm:$0xff]
  %v254 = vld [vmem:[%s2 + $0x70] sm:$0xff]
  %v255 = vld [vmem:[%s2 + $0x78] sm:$0xff]
  %257 = vset.pattern.permute.xlu0 0
  %258 = vperm.xlu0 %257, %v240
  %v259 = vpop.permute.xlu0 %258
  %262 = vset.pattern.permute.xlu0 0
  %263 = vperm.xlu0 %262, %v241
  %v264 = vpop.permute.xlu0 %263
  %267 = vset.pattern.permute.xlu0 0
  %268 = vperm.xlu0 %267, %v242
  %v269 = vpop.permute.xlu0 %268
  %272 = vset.pattern.permute.xlu0 0
  %273 = vperm.xlu0 %272, %v243
  %v274 = vpop.permute.xlu0 %273
  %277 = vset.pattern.permute.xlu0 0
  %278 = vperm.xlu0 %277, %v244
  %v279 = vpop.permute.xlu0 %278
  %282 = vset.pattern.permute.xlu0 0
  %283 = vperm.xlu0 %282, %v245
  %v284 = vpop.permute.xlu0 %283
  %287 = vset.pattern.permute.xlu0 0
  %288 = vperm.xlu0 %287, %v246
  %v289 = vpop.permute.xlu0 %288
  %292 = vset.pattern.permute.xlu0 0
  %293 = vperm.xlu0 %292, %v247
  %v294 = vpop.permute.xlu0 %293
  %297 = vset.pattern.permute.xlu0 0
  %298 = vperm.xlu0 %297, %v248
  %v299 = vpop.permute.xlu0 %298
  %302 = vset.pattern.permute.xlu0 0
  %303 = vperm.xlu0 %302, %v249
  %v304 = vpop.permute.xlu0 %303
  %307 = vset.pattern.permute.xlu0 0
  %308 = vperm.xlu0 %307, %v250
  %v309 = vpop.permute.xlu0 %308
  %312 = vset.pattern.permute.xlu0 0
  %313 = vperm.xlu0 %312, %v251
  %v314 = vpop.permute.xlu0 %313
  %317 = vset.pattern.permute.xlu0 0
  %318 = vperm.xlu0 %317, %v252
  %v319 = vpop.permute.xlu0 %318
  %322 = vset.pattern.permute.xlu0 0
  %323 = vperm.xlu0 %322, %v253
  %v324 = vpop.permute.xlu0 %323
  %327 = vset.pattern.permute.xlu0 0
  %328 = vperm.xlu0 %327, %v254
  %v329 = vpop.permute.xlu0 %328
  %332 = vset.pattern.permute.xlu0 0
  %333 = vperm.xlu0 %332, %v255
  %v334 = vpop.permute.xlu0 %333
  %v336 = vmul.f32 %v178, %v259
  %v337 = vmul.f32 %v181, %v264
  %v338 = vmul.f32 %v186, %v269
  %v339 = vmul.f32 %v189, %v274
  %v340 = vmul.f32 %v194, %v279
  %v341 = vmul.f32 %v197, %v284
  %v342 = vmul.f32 %v202, %v289
  %v343 = vmul.f32 %v205, %v294
  %v344 = vmul.f32 %v210, %v299
  %v345 = vmul.f32 %v213, %v304
  %v346 = vmul.f32 %v218, %v309
  %v347 = vmul.f32 %v221, %v314
  %v348 = vmul.f32 %v226, %v319
  %v349 = vmul.f32 %v229, %v324
  %v350 = vmul.f32 %v234, %v329
  %v351 = vmul.f32 %v237, %v334
  %v352 = vpack.c.bf16 %v337, %v336
  %v353 = vpack.c.bf16 %v339, %v338
  %v354 = vpack.c.bf16 %v341, %v340
  %v355 = vpack.c.bf16 %v343, %v342
  %v356 = vpack.c.bf16 %v345, %v344
  %v357 = vpack.c.bf16 %v347, %v346
  %v358 = vpack.c.bf16 %v349, %v348
  %v359 = vpack.c.bf16 %v351, %v350
  %v368 = vunpack.c.l.b16 %v352
  %v369 = vunpack.c.h.b16 %v352
  %v370 = vunpack.c.l.b16 %v353
  %v371 = vunpack.c.h.b16 %v353
  %v372 = vunpack.c.l.b16 %v354
  %v373 = vunpack.c.h.b16 %v354
  %v374 = vunpack.c.l.b16 %v355
  %v375 = vunpack.c.h.b16 %v355
  %v376 = vunpack.c.l.b16 %v356
  %v377 = vunpack.c.h.b16 %v356
  %v378 = vunpack.c.l.b16 %v357
  %v379 = vunpack.c.h.b16 %v357
  %v380 = vunpack.c.l.b16 %v358
  %v381 = vunpack.c.h.b16 %v358
  %v382 = vunpack.c.l.b16 %v359
  %v383 = vunpack.c.h.b16 %v359
  %v384 = vpack.c.b16 %v368, %v368
  %v385 = vpack.c.b16 %v369, %v369
  %v386 = vpack.c.b16 %v370, %v370
  %v387 = vpack.c.b16 %v371, %v371
  %v388 = vpack.c.b16 %v372, %v372
  %v389 = vpack.c.b16 %v373, %v373
  %v390 = vpack.c.b16 %v374, %v374
  %v391 = vpack.c.b16 %v375, %v375
  %v392 = vpack.c.b16 %v376, %v376
  %v393 = vpack.c.b16 %v377, %v377
  %v394 = vpack.c.b16 %v378, %v378
  %v395 = vpack.c.b16 %v379, %v379
  %v396 = vpack.c.b16 %v380, %v380
  %v397 = vpack.c.b16 %v381, %v381
  %v398 = vpack.c.b16 %v382, %v382
  %v399 = vpack.c.b16 %v383, %v383
  %416 = vst [vmem:[%s3] sm:$0xf] %v384
  %417 = vst [vmem:[%s3 + $0x4] sm:$0xf] %v385
  %418 = vst [vmem:[%s3 + $0x8] sm:$0xf] %v386
  %419 = vst [vmem:[%s3 + $0xc] sm:$0xf] %v387
  %420 = vst [vmem:[%s3 + $0x10] sm:$0xf] %v388
  %421 = vst [vmem:[%s3 + $0x14] sm:$0xf] %v389
  %422 = vst [vmem:[%s3 + $0x18] sm:$0xf] %v390
  %423 = vst [vmem:[%s3 + $0x1c] sm:$0xf] %v391
  %424 = vst [vmem:[%s3 + $0x20] sm:$0xf] %v392
  %425 = vst [vmem:[%s3 + $0x24] sm:$0xf] %v393
  %426 = vst [vmem:[%s3 + $0x28] sm:$0xf] %v394
  %427 = vst [vmem:[%s3 + $0x2c] sm:$0xf] %v395
  %428 = vst [vmem:[%s3 + $0x30] sm:$0xf] %v396
  %429 = vst [vmem:[%s3 + $0x34] sm:$0xf] %v397
  %430 = vst [vmem:[%s3 + $0x38] sm:$0xf] %v398
  %431 = vst [vmem:[%s3 + $0x3c] sm:$0xf] %v399
  // Predicated region
  $region14: #{egl_gcn_conv_forward.2} parent=0 // pred_check
    _
  $region15: #{egl_gcn_conv_forward.2} parent=0 // pred_check_branch
    %433 = sbr.rel (0) target = $region17
  $region16: #{egl_gcn_conv_forward.2} parent=0 // pred_region
    _
  $region17: #{egl_gcn_conv_forward.2} parent=0 // pred_fallthru
    _
  // Predicated region
  $region18: #{egl_gcn_conv_forward.2} parent=0 // pred_check
    _
  $region19: #{egl_gcn_conv_forward.2} parent=0 // pred_check_branch
    %435 = sbr.rel (0) target = $region21
  $region20: #{egl_gcn_conv_forward.2} parent=0 // pred_region
    _
  $region21: #{egl_gcn_conv_forward.2} parent=0 // pred_fallthru
    _

</llo_original>
